<compile_context>
chip_gen: v6e
topology: v6e:2x2x1
jax: 0.10.0
libtpu: 0.0.40
codegen_flags: <defaults>
</compile_context>

<pallas_src>
import numpy as np

import jax
import jax.numpy as jnp
from jax.experimental import pallas as pl
from jax.experimental.pallas import tpu as pltpu


def _yolo_decode_kernel(x_ref, scale_ref, is_wh_ref, use_gx_ref, use_gy_ref,
                        gxs_ref, gys_ref, out_ref):
    """Decode one (rows_block, GGp) slab of raw YOLO predictions.

    Row layout : row  = (batch-in-block)*A*C5 + anchor*C5 + attr
    Lane layout: lane = gy*G + gx   (padded up to a multiple of 128)

    scale_ref / is_wh_ref / use_gx_ref / use_gy_ref : (rows_block, 1) f32
    gxs_ref / gys_ref                               : (1, GGp) f32 (gx*stride, gy*stride)
    """
    pred = x_ref[...].astype(jnp.float32)            # upcast in-register (bf16 ok)
    sig = jax.nn.sigmoid(pred)                       # EUP
    ex = jnp.exp(pred)                               # EUP

    # Select exp on w/h rows, sigmoid elsewhere.  The select (not arithmetic)
    # discards any exp overflow on non-w/h rows before it can create NaNs.
    base = jnp.where(is_wh_ref[...] > 0.5, ex, sig)

    # Grid-cell offset: gx*stride on attr-0 rows, gy*stride on attr-1 rows,
    # zero elsewhere.  (rows,1) x (1,GGp) outer-broadcasts.
    off = use_gx_ref[...] * gxs_ref[...] + use_gy_ref[...] * gys_ref[...]

    # Unified decode: out = base * row_scale + row_offset  (single full store).
    out_ref[...] = (base * scale_ref[...] + off).astype(out_ref.dtype)


def yolo_layer_forward(x, anchors_masked, num_classes, img_dim):
    """Pallas implementation of YOLOLayer.forward.

    x: (B, C, G, G), NCHW, with C = num_anchors * (5 + num_classes).
    Returns (B, num_anchors * G * G, 5 + num_classes) float32.
    """
    B, C, G, _ = x.shape
    A = len(anchors_masked)
    C5 = 5 + num_classes
    assert C == A * C5, "channel dim must equal num_anchors * (5 + num_classes)"
    GG = G * G
    stride = float(img_dim) / float(G)
    rows_per_batch = A * C5

    # Lane-dense layout: pad G*G up to a multiple of 128 (unmasked stores).
    GGp = pl.cdiv(GG, 128) * 128
    x_r = x.reshape(B, rows_per_batch, GG)
    if GGp != GG:
        x_r = jnp.pad(x_r, ((0, 0), (0, 0), (0, GGp - GG)))
    x_flat = x_r.reshape(B * rows_per_batch, GGp)     # pure-view flatten

    # ---- choose batches-per-block ------------------------------------------
    # Biggest nb dividing B with a block of at most a few MiB, rows a multiple
    # of 8, and at least 2 grid steps when B >= 2 (v7x has 2 TensorCores).
    target_block_bytes = 2 << 20
    nb = 1
    for cand in range(1, B + 1):
        if B % cand:
            continue
        rows_c = cand * rows_per_batch
        if rows_c % 8 != 0 and rows_c != B * rows_per_batch:
            continue                                  # would break (8,128) rule
        if rows_c * GGp * 4 > target_block_bytes:
            continue
        if B >= 2 and B // cand < 2:
            continue                                  # keep >= 2 grid steps
        nb = cand
    rows_block = nb * rows_per_batch
    if rows_block % 8 != 0 and rows_block != B * rows_per_batch:
        nb = B                                        # fall back: single full block
        rows_block = B * rows_per_batch
    grid = (B // nb,)

    # ---- host-side row / lane constants (tiny trace-time arrays) ------------
    attr = np.arange(rows_per_batch) % C5
    anc = np.arange(rows_per_batch) // C5
    aw = np.asarray([a[0] for a in anchors_masked], np.float32)[anc]
    ah = np.asarray([a[1] for a in anchors_masked], np.float32)[anc]

    scale_1b = np.ones(rows_per_batch, np.float32)
    scale_1b[attr == 0] = stride
    scale_1b[attr == 1] = stride
    scale_1b[attr == 2] = aw[attr == 2]
    scale_1b[attr == 3] = ah[attr == 3]
    is_wh_1b = ((attr == 2) | (attr == 3)).astype(np.float32)
    use_gx_1b = (attr == 0).astype(np.float32)
    use_gy_1b = (attr == 1).astype(np.float32)

    def col(v):  # tile across the nb batch elements in one block -> (rows_block, 1)
        return jnp.asarray(np.tile(v, nb).reshape(rows_block, 1))

    lanes = np.arange(GGp)
    gxs = jnp.asarray(((lanes % G) * stride).astype(np.float32).reshape(1, GGp))
    gys = jnp.asarray(((lanes // G) * stride).astype(np.float32).reshape(1, GGp))

    row_spec = pl.BlockSpec((rows_block, 1), lambda i: (0, 0))
    lane_spec = pl.BlockSpec((1, GGp), lambda i: (0, 0))

    out = pl.pallas_call(
        _yolo_decode_kernel,
        out_shape=jax.ShapeDtypeStruct((B * rows_per_batch, GGp), jnp.float32),
        grid_spec=pl.GridSpec(
            grid=grid,
            in_specs=[
                pl.BlockSpec((rows_block, GGp), lambda i: (i, 0)),
                row_spec, row_spec, row_spec, row_spec,
                lane_spec, lane_spec,
            ],
            out_specs=pl.BlockSpec((rows_block, GGp), lambda i: (i, 0)),
        ),
        compiler_params=pltpu.CompilerParams(
            dimension_semantics=("parallel",),
            vmem_limit_bytes=32 << 20),
    )(x_flat, col(scale_1b), col(is_wh_1b), col(use_gx_1b), col(use_gy_1b),
      gxs, gys)

    # Glue back to the module's output layout: (B, A*G*G, 5+num_classes).
    # TODO(synk): if the downstream consumer can take attribute-major
    # (B, A*C5, G*G) layout, drop this transpose (it re-reads/writes the tensor).
    out = out.reshape(B, A, C5, GGp)[..., :GG]
    pred = jnp.transpose(out, (0, 1, 3, 2)).reshape(B, A * GG, C5)
    return pred


def yolo_layer_reference(x, anchors_masked, num_classes, img_dim):
    """Pure-JAX reference mirroring the PyTorch forward exactly."""
    B, C, G, _ = x.shape
    A = len(anchors_masked)
    C5 = 5 + num_classes
    stride = img_dim / G

    prediction = jnp.transpose(x.reshape(B, A, C5, G, G), (0, 1, 3, 4, 2))
    x_centers = jax.nn.sigmoid(prediction[..., 0])
    y_centers = jax.nn.sigmoid(prediction[..., 1])
    pw = prediction[..., 2]
    ph = prediction[..., 3]
    obj_conf = jax.nn.sigmoid(prediction[..., 4])
    class_scores = jax.nn.sigmoid(prediction[..., 5:])

    grid_x = jnp.tile(jnp.arange(G, dtype=x.dtype), (G, 1)).reshape(1, 1, G, G)
    grid_y = jnp.transpose(grid_x, (0, 1, 3, 2))
    anchor_w = jnp.asarray([a[0] for a in anchors_masked],
                           dtype=jnp.float32).reshape(1, A, 1, 1)
    anchor_h = jnp.asarray([a[1] for a in anchors_masked],
                           dtype=jnp.float32).reshape(1, A, 1, 1)

    bx = ((x_centers + grid_x) * stride)[..., None]
    by = ((y_centers + grid_y) * stride)[..., None]
    bw = (jnp.exp(pw) * anchor_w)[..., None]
    bh = (jnp.exp(ph) * anchor_h)[..., None]
    obj = obj_conf[..., None]

    pred = jnp.concatenate([bx, by, bw, bh, obj, class_scores], axis=-1)
    return pred.reshape(B, -1, C5)


if __name__ == "__main__":
    # Module config (deterministic, synthetic).
    all_anchors = [(10.0, 13.0), (16.0, 30.0), (33.0, 23.0),
                   (30.0, 61.0), (62.0, 45.0), (59.0, 119.0)]
    mask = [0, 1, 2]
    anchors_masked = [all_anchors[i] for i in mask]
    num_classes = 3
    img_dim = 64

    num_anchors = len(anchors_masked)
    bbox_attrs = 5 + num_classes           # 8
    B = 2
    G = 16
    C = num_anchors * bbox_attrs           # 24

    key = jax.random.PRNGKey(0)
    x = jax.random.normal(key, (B, C, G, G), dtype=jnp.float32)

    out = yolo_layer_forward(x, anchors_masked, num_classes, img_dim)
    out = jax.block_until_ready(out)

    ref = yolo_layer_reference(x, anchors_masked, num_classes, img_dim)
    assert out.shape == (B, num_anchors * G * G, bbox_attrs), out.shape
    assert jnp.allclose(out, ref, atol=1e-5, rtol=1e-5), "mismatch vs reference"

    print("KERNEL_OK")
</pallas_src>

<mosaic_0001>
module attributes {stable_mosaic.version = 11 : i64} {
  func.func @_yolo_decode_kernel(%arg0: i32, %arg1: memref<24x256xf32, #tpu.memory_space<vmem>>, %arg2: memref<24x1xf32, #tpu.memory_space<vmem>>, %arg3: memref<24x1xf32, #tpu.memory_space<vmem>>, %arg4: memref<24x1xf32, #tpu.memory_space<vmem>>, %arg5: memref<24x1xf32, #tpu.memory_space<vmem>>, %arg6: memref<1x256xf32, #tpu.memory_space<vmem>>, %arg7: memref<1x256xf32, #tpu.memory_space<vmem>>, %arg8: memref<24x256xf32, #tpu.memory_space<vmem>>) attributes {dimension_semantics = [#tpu.dimension_semantics<parallel>], iteration_bounds = array<i64: 2>, scalar_prefetch = 0 : i64, scratch_operands = 0 : i64, tpu.core_type = #tpu.core_type<tc>, window_params = [{transform_indices = @transform_0, window_bounds = array<i64: 24, 256>}, {pipeline_mode = #tpu.pipeline_mode<synchronous>, transform_indices = @transform_1, window_bounds = array<i64: 24, 1>}, {pipeline_mode = #tpu.pipeline_mode<synchronous>, transform_indices = @transform_2, window_bounds = array<i64: 24, 1>}, {pipeline_mode = #tpu.pipeline_mode<synchronous>, transform_indices = @transform_3, window_bounds = array<i64: 24, 1>}, {pipeline_mode = #tpu.pipeline_mode<synchronous>, transform_indices = @transform_4, window_bounds = array<i64: 24, 1>}, {pipeline_mode = #tpu.pipeline_mode<synchronous>, transform_indices = @transform_5, window_bounds = array<i64: 1, 256>}, {pipeline_mode = #tpu.pipeline_mode<synchronous>, transform_indices = @transform_6, window_bounds = array<i64: 1, 256>}, {transform_indices = @transform_7, window_bounds = array<i64: 24, 256>}]} {
    %c0 = arith.constant 0 : index
    %c0_0 = arith.constant 0 : index
    %0 = vector.load %arg1[%c0, %c0_0] : memref<24x256xf32, #tpu.memory_space<vmem>>, vector<24x256xf32>
    %1 = arith.negf %0 : vector<24x256xf32>
    %2 = math.exp %1 : vector<24x256xf32>
    %cst = arith.constant 1.000000e+00 : f32
    %3 = vector.broadcast %cst : f32 to vector<24x256xf32>
    %4 = arith.addf %3, %2 : vector<24x256xf32>
    %5 = arith.divf %3, %4 : vector<24x256xf32>
    %6 = math.exp %0 : vector<24x256xf32>
    %c0_1 = arith.constant 0 : index
    %c0_2 = arith.constant 0 : index
    %7 = vector.load %arg3[%c0_1, %c0_2] : memref<24x1xf32, #tpu.memory_space<vmem>>, vector<24x1xf32>
    %cst_3 = arith.constant 5.000000e-01 : f32
    %8 = vector.broadcast %cst_3 : f32 to vector<24x1xf32>
    %9 = arith.cmpf ogt, %7, %8 : vector<24x1xf32>
    %10 = vector.shape_cast %9 : vector<24x1xi1> to vector<24x1xi1>
    %11 = vector.broadcast %10 : vector<24x1xi1> to vector<24x256xi1>
    %12 = arith.select %11, %6, %5 : vector<24x256xi1>, vector<24x256xf32>
    %c0_4 = arith.constant 0 : index
    %c0_5 = arith.constant 0 : index
    %13 = vector.load %arg4[%c0_4, %c0_5] : memref<24x1xf32, #tpu.memory_space<vmem>>, vector<24x1xf32>
    %c0_6 = arith.constant 0 : index
    %c0_7 = arith.constant 0 : index
    %14 = vector.load %arg6[%c0_6, %c0_7] : memref<1x256xf32, #tpu.memory_space<vmem>>, vector<1x256xf32>
    %15 = vector.broadcast %13 : vector<24x1xf32> to vector<24x256xf32>
    %16 = vector.broadcast %14 : vector<1x256xf32> to vector<24x256xf32>
    %17 = arith.mulf %15, %16 : vector<24x256xf32>
    %c0_8 = arith.constant 0 : index
    %c0_9 = arith.constant 0 : index
    %18 = vector.load %arg5[%c0_8, %c0_9] : memref<24x1xf32, #tpu.memory_space<vmem>>, vector<24x1xf32>
    %c0_10 = arith.constant 0 : index
    %c0_11 = arith.constant 0 : index
    %19 = vector.load %arg7[%c0_10, %c0_11] : memref<1x256xf32, #tpu.memory_space<vmem>>, vector<1x256xf32>
    %20 = vector.broadcast %18 : vector<24x1xf32> to vector<24x256xf32>
    %21 = vector.broadcast %19 : vector<1x256xf32> to vector<24x256xf32>
    %22 = arith.mulf %20, %21 : vector<24x256xf32>
    %23 = arith.addf %17, %22 : vector<24x256xf32>
    %c0_12 = arith.constant 0 : index
    %c0_13 = arith.constant 0 : index
    %24 = vector.load %arg2[%c0_12, %c0_13] : memref<24x1xf32, #tpu.memory_space<vmem>>, vector<24x1xf32>
    %25 = vector.broadcast %24 : vector<24x1xf32> to vector<24x256xf32>
    %26 = arith.mulf %12, %25 : vector<24x256xf32>
    %27 = arith.addf %26, %23 : vector<24x256xf32>
    %c0_14 = arith.constant 0 : index
    %c0_15 = arith.constant 0 : index
    %28 = vector.load %arg8[%c0_14, %c0_15] : memref<24x256xf32, #tpu.memory_space<vmem>>, vector<24x256xf32>
    tpu.vector_store %arg8[%c0_14, %c0_15], %27 {strides = array<i32>} : memref<24x256xf32, #tpu.memory_space<vmem>>, vector<24x256xf32>,
    return
  }
  func.func @transform_0(%arg0: i32) -> (i32, i32) {
    %c0_i32 = arith.constant 0 : i32
    %c0_i32_0 = arith.constant 0 : i32
    return %arg0, %c0_i32 : i32, i32
  }
  func.func @transform_1(%arg0: i32) -> (i32, i32) {
    %c0_i32 = arith.constant 0 : i32
    %c0_i32_0 = arith.constant 0 : i32
    %c0_i32_1 = arith.constant 0 : i32
    return %c0_i32, %c0_i32_0 : i32, i32
  }
  func.func @transform_2(%arg0: i32) -> (i32, i32) {
    %c0_i32 = arith.constant 0 : i32
    %c0_i32_0 = arith.constant 0 : i32
    %c0_i32_1 = arith.constant 0 : i32
    return %c0_i32, %c0_i32_0 : i32, i32
  }
  func.func @transform_3(%arg0: i32) -> (i32, i32) {
    %c0_i32 = arith.constant 0 : i32
    %c0_i32_0 = arith.constant 0 : i32
    %c0_i32_1 = arith.constant 0 : i32
    return %c0_i32, %c0_i32_0 : i32, i32
  }
  func.func @transform_4(%arg0: i32) -> (i32, i32) {
    %c0_i32 = arith.constant 0 : i32
    %c0_i32_0 = arith.constant 0 : i32
    %c0_i32_1 = arith.constant 0 : i32
    return %c0_i32, %c0_i32_0 : i32, i32
  }
  func.func @transform_5(%arg0: i32) -> (i32, i32) {
    %c0_i32 = arith.constant 0 : i32
    %c0_i32_0 = arith.constant 0 : i32
    %c0_i32_1 = arith.constant 0 : i32
    return %c0_i32, %c0_i32_0 : i32, i32
  }
  func.func @transform_6(%arg0: i32) -> (i32, i32) {
    %c0_i32 = arith.constant 0 : i32
    %c0_i32_0 = arith.constant 0 : i32
    %c0_i32_1 = arith.constant 0 : i32
    return %c0_i32, %c0_i32_0 : i32, i32
  }
  func.func @transform_7(%arg0: i32) -> (i32, i32) {
    %c0_i32 = arith.constant 0 : i32
    %c0_i32_0 = arith.constant 0 : i32
    return %arg0, %c0_i32 : i32, i32
  }
}

</mosaic_0001>

<llo_original>
// kernel: tpu_custom_call.1
$region0: #{tpu_custom_call.1}
  #allocation0 [shape = 'u32[]', space=smem, size = 0x4, offset = 0x4, fixed_abs, tag = 'smem constant byte address 0x4 - core index']
  #allocation1 [shape = 'u32[144,128]{1,0:T(1,128)}', space=vmem, size = 0x12000, scoped, tag = 'internal scratch']
  %s0 = inlined_call_operand.vmem [shape: f32[48,256], index: 0, kind: input, shape index: {}]
  %s1 = inlined_call_operand.vmem [shape: f32[24,1], index: 1, kind: input, shape index: {}]
  %s2 = inlined_call_operand.vmem [shape: f32[24,1], index: 2, kind: input, shape index: {}]
  %s3 = inlined_call_operand.vmem [shape: f32[24,1], index: 3, kind: input, shape index: {}]
  %s4 = inlined_call_operand.vmem [shape: f32[24,1], index: 4, kind: input, shape index: {}]
  %s5 = inlined_call_operand.vmem [shape: f32[1,256], index: 5, kind: input, shape index: {}]
  %s6 = inlined_call_operand.vmem [shape: f32[1,256], index: 6, kind: input, shape index: {}]
  %s7 = inlined_call_operand.hbm [shape: f32[48,256], index: 7, kind: output, shape index: {}]
  %s8 = sld [smem:[#allocation0]]
  $region61: #{tpu_custom_call.1} parent=0
    _
  %s10 = ssub.s32 1, %s8
  %s11 = scalar_select 0, %s10, %s8
  $region1: #{tpu_custom_call.1} parent=0
    #allocation2 [shape = 'u8[49152]{0}', space=vmem, size = 0xc000, scoped, tag = 'output window, operand 0']
    #allocation3 [shape = 's32[2]{0}', space=sflag, size = 0x8, scoped, tag = 'scoped memory for tpu_custom_call.1']
    %12 = vsyncpa [#allocation3], 0
    %s13 = scalar_lea.sflag [#allocation3], 1
    %14 = vsyncpa %s13, 0
    loop: start=0, step=1, limit=4
    $region2: #{tpu_custom_call.1} parent=1 // loop_pre_header
      _
    $region3: #{tpu_custom_call.1} parent=1 // loop_header
      %s16 = sphi 0, %s20
      %p17 = scmp.ge.s32.totalorder %s16, 4
      %s26 = sphi 0, %s28
      %s29 = sphi 0, %s26
      %s30 = sphi 0, %s29
      %s46 = sphi 0, %s30
      %s50 = sphi 0, %s50
      %s52 = sphi 0, %s50
      %s53 = sphi 0, %s52
      %s67 = sphi 0, %s53
      %s71 = sphi 0, %s71
      %s73 = sphi 0, %s71
      %s74 = sphi 0, %s73
      %s88 = sphi 0, %s74
      %s92 = sphi 0, %s92
      %s94 = sphi 0, %s92
      %s95 = sphi 0, %s94
      %s109 = sphi 0, %s95
      %s113 = sphi 0, %s113
      %s115 = sphi 0, %s113
      %s116 = sphi 0, %s115
      %s130 = sphi 0, %s116
      %s134 = sphi 0, %s134
      %s136 = sphi 0, %s134
      %s137 = sphi 0, %s136
      %s151 = sphi 0, %s137
      %s155 = sphi 0, %s155
      %s157 = sphi 0, %s155
      %s158 = sphi 0, %s157
      %s172 = sphi 0, %s158
      %s178 = sphi 0, %s180
      %s181 = sphi 0, %s178
      %s182 = sphi 0, %s181
      %s198 = sphi 0, %s182
    $region4: #{tpu_custom_call.1} parent=1 // loop_header_branch
      %19 = sbr.rel (%p17) target = $region8
    $region5: #{tpu_custom_call.1} parent=1 // loop_body
      %s21 = ssub.s32 %s16, 1
      %s22 = ssub.s32 %s16, 2
      %s23 = sadd.s32 %s16, 1
      %s24 = ssub.s32 %s16, %s23
      %p25 = scmp.eq.s32.totalorder %s24, 0
      %s27 = sadd.s32 %s26, 1
      %s28 = scalar_select %p25, %s26, %s27
      %p31 = pneg %p25
      %p32 = scmp.eq.s32.totalorder %s16, 1
      %p33 = por %p31, %p32
      %p34 = scmp.ne.s32.totalorder %s26, %s29
      %p35 = scmp.eq.s32.totalorder %s16, 0
      %p36 = por %p34, %p35
      %p37 = scmp.ne.s32.totalorder %s26, %s29
      %p38 = scmp.eq.s32.totalorder %s21, 1
      %p39 = por %p37, %p38
      %p40 = scmp.ne.s32.totalorder %s29, %s30
      %p41 = scmp.eq.s32.totalorder %s21, 0
      %p42 = por %p40, %p41
      %p43 = scmp.ne.s32.totalorder %s29, %s30
      %p44 = scmp.eq.s32.totalorder %s22, 1
      %p45 = por %p43, %p44
      %p47 = scmp.ne.s32.totalorder %s30, %s46
      %p48 = scmp.eq.s32.totalorder %s22, 0
      %p49 = por %p47, %p48
      %s51 = sadd.s32 %s50, 1
      %p54 = scmp.eq.s32.totalorder %s16, 1
      %p55 = scmp.ne.s32.totalorder %s50, %s52
      %p56 = scmp.eq.s32.totalorder %s16, 0
      %p57 = por %p55, %p56
      %p58 = scmp.ne.s32.totalorder %s50, %s52
      %p59 = scmp.eq.s32.totalorder %s21, 1
      %p60 = por %p58, %p59
      %p61 = scmp.ne.s32.totalorder %s52, %s53
      %p62 = scmp.eq.s32.totalorder %s21, 0
      %p63 = por %p61, %p62
      %p64 = scmp.ne.s32.totalorder %s52, %s53
      %p65 = scmp.eq.s32.totalorder %s22, 1
      %p66 = por %p64, %p65
      %p68 = scmp.ne.s32.totalorder %s53, %s67
      %p69 = scmp.eq.s32.totalorder %s22, 0
      %p70 = por %p68, %p69
      %s72 = sadd.s32 %s71, 1
      %p75 = scmp.eq.s32.totalorder %s16, 1
      %p76 = scmp.ne.s32.totalorder %s71, %s73
      %p77 = scmp.eq.s32.totalorder %s16, 0
      %p78 = por %p76, %p77
      %p79 = scmp.ne.s32.totalorder %s71, %s73
      %p80 = scmp.eq.s32.totalorder %s21, 1
      %p81 = por %p79, %p80
      %p82 = scmp.ne.s32.totalorder %s73, %s74
      %p83 = scmp.eq.s32.totalorder %s21, 0
      %p84 = por %p82, %p83
      %p85 = scmp.ne.s32.totalorder %s73, %s74
      %p86 = scmp.eq.s32.totalorder %s22, 1
      %p87 = por %p85, %p86
      %p89 = scmp.ne.s32.totalorder %s74, %s88
      %p90 = scmp.eq.s32.totalorder %s22, 0
      %p91 = por %p89, %p90
      %s93 = sadd.s32 %s92, 1
      %p96 = scmp.eq.s32.totalorder %s16, 1
      %p97 = scmp.ne.s32.totalorder %s92, %s94
      %p98 = scmp.eq.s32.totalorder %s16, 0
      %p99 = por %p97, %p98
      %p100 = scmp.ne.s32.totalorder %s92, %s94
      %p101 = scmp.eq.s32.totalorder %s21, 1
      %p102 = por %p100, %p101
      %p103 = scmp.ne.s32.totalorder %s94, %s95
      %p104 = scmp.eq.s32.totalorder %s21, 0
      %p105 = por %p103, %p104
      %p106 = scmp.ne.s32.totalorder %s94, %s95
      %p107 = scmp.eq.s32.totalorder %s22, 1
      %p108 = por %p106, %p107
      %p110 = scmp.ne.s32.totalorder %s95, %s109
      %p111 = scmp.eq.s32.totalorder %s22, 0
      %p112 = por %p110, %p111
      %s114 = sadd.s32 %s113, 1
      %p117 = scmp.eq.s32.totalorder %s16, 1
      %p118 = scmp.ne.s32.totalorder %s113, %s115
      %p119 = scmp.eq.s32.totalorder %s16, 0
      %p120 = por %p118, %p119
      %p121 = scmp.ne.s32.totalorder %s113, %s115
      %p122 = scmp.eq.s32.totalorder %s21, 1
      %p123 = por %p121, %p122
      %p124 = scmp.ne.s32.totalorder %s115, %s116
      %p125 = scmp.eq.s32.totalorder %s21, 0
      %p126 = por %p124, %p125
      %p127 = scmp.ne.s32.totalorder %s115, %s116
      %p128 = scmp.eq.s32.totalorder %s22, 1
      %p129 = por %p127, %p128
      %p131 = scmp.ne.s32.totalorder %s116, %s130
      %p132 = scmp.eq.s32.totalorder %s22, 0
      %p133 = por %p131, %p132
      %s135 = sadd.s32 %s134, 1
      %p138 = scmp.eq.s32.totalorder %s16, 1
      %p139 = scmp.ne.s32.totalorder %s134, %s136
      %p140 = scmp.eq.s32.totalorder %s16, 0
      %p141 = por %p139, %p140
      %p142 = scmp.ne.s32.totalorder %s134, %s136
      %p143 = scmp.eq.s32.totalorder %s21, 1
      %p144 = por %p142, %p143
      %p145 = scmp.ne.s32.totalorder %s136, %s137
      %p146 = scmp.eq.s32.totalorder %s21, 0
      %p147 = por %p145, %p146
      %p148 = scmp.ne.s32.totalorder %s136, %s137
      %p149 = scmp.eq.s32.totalorder %s22, 1
      %p150 = por %p148, %p149
      %p152 = scmp.ne.s32.totalorder %s137, %s151
      %p153 = scmp.eq.s32.totalorder %s22, 0
      %p154 = por %p152, %p153
      %s156 = sadd.s32 %s155, 1
      %p159 = scmp.eq.s32.totalorder %s16, 1
      %p160 = scmp.ne.s32.totalorder %s155, %s157
      %p161 = scmp.eq.s32.totalorder %s16, 0
      %p162 = por %p160, %p161
      %p163 = scmp.ne.s32.totalorder %s155, %s157
      %p164 = scmp.eq.s32.totalorder %s21, 1
      %p165 = por %p163, %p164
      %p166 = scmp.ne.s32.totalorder %s157, %s158
      %p167 = scmp.eq.s32.totalorder %s21, 0
      %p168 = por %p166, %p167
      %p169 = scmp.ne.s32.totalorder %s157, %s158
      %p170 = scmp.eq.s32.totalorder %s22, 1
      %p171 = por %p169, %p170
      %p173 = scmp.ne.s32.totalorder %s158, %s172
      %p174 = scmp.eq.s32.totalorder %s22, 0
      %p175 = por %p173, %p174
      %s176 = ssub.s32 %s16, %s23
      %p177 = scmp.eq.s32.totalorder %s176, 0
      %s179 = sadd.s32 %s178, 1
      %s180 = scalar_select %p177, %s178, %s179
      %p183 = pneg %p177
      %p184 = scmp.eq.s32.totalorder %s16, 1
      %p185 = por %p183, %p184
      %p186 = scmp.ne.s32.totalorder %s178, %s181
      %p187 = scmp.eq.s32.totalorder %s16, 0
      %p188 = por %p186, %p187
      %p189 = scmp.ne.s32.totalorder %s178, %s181
      %p190 = scmp.eq.s32.totalorder %s21, 1
      %p191 = por %p189, %p190
      %p192 = scmp.ne.s32.totalorder %s181, %s182
      %p193 = scmp.eq.s32.totalorder %s21, 0
      %p194 = por %p192, %p193
      %p195 = scmp.ne.s32.totalorder %s181, %s182
      %p196 = scmp.eq.s32.totalorder %s22, 1
      %p197 = por %p195, %p196
      %p199 = scmp.ne.s32.totalorder %s182, %s198
      %p200 = scmp.eq.s32.totalorder %s22, 0
      %p201 = por %p199, %p200
      %p202 = scmp.le.s32.totalorder 1, %s16
      %p203 = scmp.lt.s32.totalorder %s16, 3
      %p204 = pnand %p202, %p203
      %p205 = pneg %p204
      // Predicated region
      $region9: #{tpu_custom_call.1} parent=5 // pred_check
        _
      $region10: #{tpu_custom_call.1} parent=5 // pred_check_branch
        %207 = sbr.rel (%p204) target = $region12
      $region11: #{tpu_custom_call.1} parent=5 // pred_region
        %s208 = ssub.s32 %s16, 1
        // Predicated region
        $region13: #{tpu_custom_call.1} parent=11 // pred_check
          %p209 = pneg %p63
        $region14: #{tpu_custom_call.1} parent=11 // pred_check_branch
          %211 = sbr.rel (%p209) target = $region16
        $region15: #{tpu_custom_call.1} parent=11 // pred_region
          _
        $region16: #{tpu_custom_call.1} parent=11 // pred_fallthru
          _
        // Predicated region
        $region17: #{tpu_custom_call.1} parent=11 // pred_check
          %p212 = pneg %p84
        $region18: #{tpu_custom_call.1} parent=11 // pred_check_branch
          %214 = sbr.rel (%p212) target = $region20
        $region19: #{tpu_custom_call.1} parent=11 // pred_region
          _
        $region20: #{tpu_custom_call.1} parent=11 // pred_fallthru
          _
        // Predicated region
        $region21: #{tpu_custom_call.1} parent=11 // pred_check
          %p215 = pneg %p105
        $region22: #{tpu_custom_call.1} parent=11 // pred_check_branch
          %217 = sbr.rel (%p215) target = $region24
        $region23: #{tpu_custom_call.1} parent=11 // pred_region
          _
        $region24: #{tpu_custom_call.1} parent=11 // pred_fallthru
          _
        // Predicated region
        $region25: #{tpu_custom_call.1} parent=11 // pred_check
          %p218 = pneg %p126
        $region26: #{tpu_custom_call.1} parent=11 // pred_check_branch
          %220 = sbr.rel (%p218) target = $region28
        $region27: #{tpu_custom_call.1} parent=11 // pred_region
          _
        $region28: #{tpu_custom_call.1} parent=11 // pred_fallthru
          _
        // Predicated region
        $region29: #{tpu_custom_call.1} parent=11 // pred_check
          %p221 = pneg %p147
        $region30: #{tpu_custom_call.1} parent=11 // pred_check_branch
          %223 = sbr.rel (%p221) target = $region32
        $region31: #{tpu_custom_call.1} parent=11 // pred_region
          _
        $region32: #{tpu_custom_call.1} parent=11 // pred_fallthru
          _
        // Predicated region
        $region33: #{tpu_custom_call.1} parent=11 // pred_check
          %p224 = pneg %p168
        $region34: #{tpu_custom_call.1} parent=11 // pred_check_branch
          %226 = sbr.rel (%p224) target = $region36
        $region35: #{tpu_custom_call.1} parent=11 // pred_region
          _
        $region36: #{tpu_custom_call.1} parent=11 // pred_fallthru
          _
      $region12: #{tpu_custom_call.1} parent=5 // pred_fallthru
        _
      %p227 = scmp.lt.s32.totalorder %s16, 2
      // Predicated region
      $region37: #{tpu_custom_call.1} parent=5 // pred_check
        %p228 = pneg %p227
      $region38: #{tpu_custom_call.1} parent=5 // pred_check_branch
        %230 = sbr.rel (%p228) target = $region40
      $region39: #{tpu_custom_call.1} parent=5 // pred_region
        // Predicated region
        $region41: #{tpu_custom_call.1} parent=39 // pred_check
          %p231 = pneg %p36
        $region42: #{tpu_custom_call.1} parent=39 // pred_check_branch
          %233 = sbr.rel (%p231) target = $region44
        $region43: #{tpu_custom_call.1} parent=39 // pred_region
          %s234 = smul.u32 3, %s16
          %p235 = scmp.lt.s32.totalorder %s234, 5
          %s236 = scalar_select %p235, %s234, 5
          %s237 = smul.addr %s236, 2
          %s238 = smul.addr %s237, 8
          %s239 = scalar_lea.vmem %s0, %s238
          %s240 = smul.u32 3, %s16
        $region44: #{tpu_custom_call.1} parent=39 // pred_fallthru
          _
      $region40: #{tpu_custom_call.1} parent=5 // pred_fallthru
        _
      %p241 = scmp.le.s32.totalorder 1, %s16
      %p242 = scmp.lt.s32.totalorder %s16, 3
      %p243 = pnand %p241, %p242
      %p244 = pneg %p243
      // Predicated region
      $region45: #{tpu_custom_call.1} parent=5 // pred_check
        _
      $region46: #{tpu_custom_call.1} parent=5 // pred_check_branch
        %246 = sbr.rel (%p243) target = $region48
      $region47: #{tpu_custom_call.1} parent=5 // pred_region
        %s247 = ssub.s32 %s16, 1
        %s248 = smul.u32 3, %s21
        %p249 = scmp.lt.s32.totalorder %s248, 5
        %s250 = scalar_select %p249, %s248, 5
        %s251 = smul.addr %s250, 2
        %s252 = smul.addr %s251, 8
        %s253 = scalar_lea.vmem %s0, %s252
        %p254 = pneg %p42
        %p255 = pneg %p39
        %p256 = pneg %p63
        %p257 = pneg %p60
        %p258 = pneg %p84
        %p259 = pneg %p81
        %p260 = pneg %p105
        %p261 = pneg %p102
        %p262 = pneg %p126
        %p263 = pneg %p123
        %p264 = pneg %p147
        %p265 = pneg %p144
        %p266 = pneg %p168
        %p267 = pneg %p165
        %p268 = pneg %p194
        %p269 = pneg %p191
        %s270 = sand.u32 %s181, 1
        %s271 = scalar_lea.sflag [#allocation3], %s270
        %s272 = sand.u32 %s181, 1
        %s273 = smul.addr %s272, 48
        %s274 = scalar_lea.vmem [#allocation2], %s273
        %s275 = smul.u32 3, %s21
        %p276 = scmp.lt.s32.totalorder %s275, 5
        %s277 = scalar_select %p276, %s275, 5
        %s278 = smul.addr %s277, 2
        %s279 = smul.addr %s278, 8
        %s280 = scalar_lea.vmem %s0, %s279
        %s281 = smul.u32 3, %s21
        %s282 = smul.u32 3, %s21
        %v283 = vld [vmem:[%s280] sm:$0xff]
        %v284 = vld [vmem:[%s280 + $0x8] sm:$0xff]
        %v285 = vld [vmem:[%s280 + $0x10] sm:$0xff]
        %v286 = vld [vmem:[%s280 + $0x18] sm:$0xff]
        %v287 = vld [vmem:[%s280 + $0x20] sm:$0xff]
        %v288 = vld [vmem:[%s280 + $0x28] sm:$0xff]
        %v289 = vxor.u32 %v283, 2147483648
        %v290 = vxor.u32 %v284, 2147483648
        %v291 = vxor.u32 %v285, 2147483648
        %v292 = vxor.u32 %v286, 2147483648
        %v293 = vxor.u32 %v287, 2147483648
        %v294 = vxor.u32 %v288, 2147483648
        %v295 = vmul.f32 %v289, 1.442695
        %v296 = vpow.pop %v295
        %v297 = vmul.f32 %v290, 1.442695
        %v298 = vpow.pop %v297
        %v299 = vmul.f32 %v291, 1.442695
        %v300 = vpow.pop %v299
        %v301 = vmul.f32 %v292, 1.442695
        %v302 = vpow.pop %v301
        %v303 = vmul.f32 %v293, 1.442695
        %v304 = vpow.pop %v303
        %v305 = vmul.f32 %v294, 1.442695
        %v306 = vpow.pop %v305
        %v307 = vadd.f32 %v296, 1.0
        %v308 = vadd.f32 %v298, 1.0
        %v309 = vadd.f32 %v300, 1.0
        %v310 = vadd.f32 %v302, 1.0
        %v311 = vadd.f32 %v304, 1.0
        %v312 = vadd.f32 %v306, 1.0
        %v313 = vrcp.pop %v307
        %v314 = vmul.f32 1.0, %v313
        %v315 = vrcp.pop %v308
        %v316 = vmul.f32 1.0, %v315
        %v317 = vrcp.pop %v309
        %v318 = vmul.f32 1.0, %v317
        %v319 = vrcp.pop %v310
        %v320 = vmul.f32 1.0, %v319
        %v321 = vrcp.pop %v311
        %v322 = vmul.f32 1.0, %v321
        %v323 = vrcp.pop %v312
        %v324 = vmul.f32 1.0, %v323
        %v325 = vmul.f32 %v283, 1.442695
        %v326 = vpow.pop %v325
        %v327 = vmul.f32 %v284, 1.442695
        %v328 = vpow.pop %v327
        %v329 = vmul.f32 %v285, 1.442695
        %v330 = vpow.pop %v329
        %v331 = vmul.f32 %v286, 1.442695
        %v332 = vpow.pop %v331
        %v333 = vmul.f32 %v287, 1.442695
        %v334 = vpow.pop %v333
        %v335 = vmul.f32 %v288, 1.442695
        %v336 = vpow.pop %v335
        %v337 = vld [vmem:[%s2] sm:$0xff]
        %v338 = vld [vmem:[%s2 + $0x8] sm:$0xff]
        %v339 = vld [vmem:[%s2 + $0x10] sm:$0xff]
        %vm340 = vcmp.gt.f32.partialorder %v337, 0.5
        %vm341 = vcmp.gt.f32.partialorder %v338, 0.5
        %vm342 = vcmp.gt.f32.partialorder %v339, 0.5
        %v343 = vsel %vm340, 1, 0
        %v344 = vsel %vm341, 1, 0
        %v345 = vsel %vm342, 1, 0
        %346 = vset.pattern.permute.xlu0 0
        %347 = vperm.xlu0 %346, %v343
        %v348 = vpop.permute.xlu0 %347
        %349 = vset.pattern.permute.xlu0 0
        %350 = vperm.xlu0 %349, %v344
        %v351 = vpop.permute.xlu0 %350
        %352 = vset.pattern.permute.xlu0 0
        %353 = vperm.xlu0 %352, %v345
        %v354 = vpop.permute.xlu0 %353
        %vm355 = vcmp.eq.s32.totalorder %v348, 1
        %vm356 = vcmp.eq.s32.totalorder %v351, 1
        %vm357 = vcmp.eq.s32.totalorder %v354, 1
        %v358 = vsel %vm355, %v326, %v314
        %v359 = vsel %vm355, %v328, %v316
        %v360 = vsel %vm356, %v330, %v318
        %v361 = vsel %vm356, %v332, %v320
        %v362 = vsel %vm357, %v334, %v322
        %v363 = vsel %vm357, %v336, %v324
        %v364 = vld [vmem:[%s3] sm:$0xff]
        %v365 = vld [vmem:[%s3 + $0x8] sm:$0xff]
        %v366 = vld [vmem:[%s3 + $0x10] sm:$0xff]
        %v367 = vld [vmem:[%s5] sm:$0x3]
        %369 = vset.pattern.permute.xlu0 0
        %370 = vperm.xlu0 %369, %v364
        %v371 = vpop.permute.xlu0 %370
        %374 = vset.pattern.permute.xlu0 0
        %375 = vperm.xlu0 %374, %v365
        %v376 = vpop.permute.xlu0 %375
        %379 = vset.pattern.permute.xlu0 0
        %380 = vperm.xlu0 %379, %v366
        %v381 = vpop.permute.xlu0 %380
        %v384 = vlaneseq
        %v385 = vshrl.u32 %v384, 7
        %v386 = vsub.s32 0, %v385
        %v387 = vrot.slane %v367, %v386
        %v388 = vlaneseq
        %v389 = vshrl.u32 %v388, 7
        %v390 = vsub.s32 1, %v389
        %v391 = vrot.slane %v367, %v390
        %v394 = vmul.f32 %v371, %v387
        %v395 = vmul.f32 %v371, %v391
        %v396 = vmul.f32 %v376, %v387
        %v397 = vmul.f32 %v376, %v391
        %v398 = vmul.f32 %v381, %v387
        %v399 = vmul.f32 %v381, %v391
        %v400 = vld [vmem:[%s4] sm:$0xff]
        %v401 = vld [vmem:[%s4 + $0x8] sm:$0xff]
        %v402 = vld [vmem:[%s4 + $0x10] sm:$0xff]
        %v403 = vld [vmem:[%s6] sm:$0x3]
        %405 = vset.pattern.permute.xlu0 0
        %406 = vperm.xlu0 %405, %v400
        %v407 = vpop.permute.xlu0 %406
        %410 = vset.pattern.permute.xlu0 0
        %411 = vperm.xlu0 %410, %v401
        %v412 = vpop.permute.xlu0 %411
        %415 = vset.pattern.permute.xlu0 0
        %416 = vperm.xlu0 %415, %v402
        %v417 = vpop.permute.xlu0 %416
        %v420 = vlaneseq
        %v421 = vshrl.u32 %v420, 7
        %v422 = vsub.s32 0, %v421
        %v423 = vrot.slane %v403, %v422
        %v424 = vlaneseq
        %v425 = vshrl.u32 %v424, 7
        %v426 = vsub.s32 1, %v425
        %v427 = vrot.slane %v403, %v426
        %v430 = vmul.f32 %v407, %v423
        %v431 = vmul.f32 %v407, %v427
        %v432 = vmul.f32 %v412, %v423
        %v433 = vmul.f32 %v412, %v427
        %v434 = vmul.f32 %v417, %v423
        %v435 = vmul.f32 %v417, %v427
        %v436 = vadd.f32 %v394, %v430
        %v437 = vadd.f32 %v395, %v431
        %v438 = vadd.f32 %v396, %v432
        %v439 = vadd.f32 %v397, %v433
        %v440 = vadd.f32 %v398, %v434
        %v441 = vadd.f32 %v399, %v435
        %v442 = vld [vmem:[%s1] sm:$0xff]
        %v443 = vld [vmem:[%s1 + $0x8] sm:$0xff]
        %v444 = vld [vmem:[%s1 + $0x10] sm:$0xff]
        %446 = vset.pattern.permute.xlu0 0
        %447 = vperm.xlu0 %446, %v442
        %v448 = vpop.permute.xlu0 %447
        %451 = vset.pattern.permute.xlu0 0
        %452 = vperm.xlu0 %451, %v443
        %v453 = vpop.permute.xlu0 %452
        %456 = vset.pattern.permute.xlu0 0
        %457 = vperm.xlu0 %456, %v444
        %v458 = vpop.permute.xlu0 %457
        %v460 = vmul.f32 %v358, %v448
        %v461 = vmul.f32 %v359, %v448
        %v462 = vmul.f32 %v360, %v453
        %v463 = vmul.f32 %v361, %v453
        %v464 = vmul.f32 %v362, %v458
        %v465 = vmul.f32 %v363, %v458
        %v466 = vadd.f32 %v460, %v436
        %v467 = vadd.f32 %v461, %v437
        %v468 = vadd.f32 %v462, %v438
        %v469 = vadd.f32 %v463, %v439
        %v470 = vadd.f32 %v464, %v440
        %v471 = vadd.f32 %v465, %v441
        %472 = vst [vmem:[%s274] sm:$0xff] %v466
        %473 = vst [vmem:[%s274 + $0x8] sm:$0xff] %v467
        %474 = vst [vmem:[%s274 + $0x10] sm:$0xff] %v468
        %475 = vst [vmem:[%s274 + $0x18] sm:$0xff] %v469
        %476 = vst [vmem:[%s274 + $0x20] sm:$0xff] %v470
        %477 = vst [vmem:[%s274 + $0x28] sm:$0xff] %v471
        %s478 = sand.u32 %s181, 1
        %s479 = scalar_lea.sflag [#allocation3], %s478
        %s480 = sand.u32 %s181, 1
        %s481 = smul.addr %s480, 48
        %s482 = scalar_lea.vmem [#allocation2], %s481
        // Predicated region
        $region49: #{tpu_custom_call.1} parent=47 // pred_check
          %p483 = pneg %p191
        $region50: #{tpu_custom_call.1} parent=47 // pred_check_branch
          %485 = sbr.rel (%p483) target = $region52
        $region51: #{tpu_custom_call.1} parent=47 // pred_region
          %s486 = smul.u32 3, %s21
          %s488 = ssub.s32 768, 768
          %489 = vsyncadd %s479, %s488
          %s490 = smul.addr %s486, 2
          %s491 = smul.addr %s490, 128
          %s492 = scalar_lea.hbm %s7, %s491
          %s493 = sshll.u32 %s482, 4
          %s494 = int_to_ptr.vmem [resolvable:$true] %s493
          %499 = dma.vmem_to_hbm [thread:$0]  %s494, 768, %s492, %s479, 256, 256, 16
        $region52: #{tpu_custom_call.1} parent=47 // pred_fallthru
          _
      $region48: #{tpu_custom_call.1} parent=5 // pred_fallthru
        _
      %p500 = scmp.le.s32.totalorder 2, %s16
      // Predicated region
      $region53: #{tpu_custom_call.1} parent=5 // pred_check
        %p501 = pneg %p500
      $region54: #{tpu_custom_call.1} parent=5 // pred_check_branch
        %503 = sbr.rel (%p501) target = $region56
      $region55: #{tpu_custom_call.1} parent=5 // pred_region
        %s504 = ssub.s32 %s16, 2
        // Predicated region
        $region57: #{tpu_custom_call.1} parent=55 // pred_check
          %p505 = pneg %p197
        $region58: #{tpu_custom_call.1} parent=55 // pred_check_branch
          %507 = sbr.rel (%p505) target = $region60
        $region59: #{tpu_custom_call.1} parent=55 // pred_region
          %s508 = sand.u32 %s182, 1
          %s509 = scalar_lea.sflag [#allocation3], %s508
          %s510 = sand.u32 %s182, 1
          %s511 = smul.addr %s510, 48
          %s512 = scalar_lea.vmem [#allocation2], %s511
          %513 = dma.done %s509, 768
        $region60: #{tpu_custom_call.1} parent=55 // pred_fallthru
          _
      $region56: #{tpu_custom_call.1} parent=5 // pred_fallthru
        _
    $region6: #{tpu_custom_call.1} parent=1 // loop_footer
      %s20 = sadd.s32 1, %s16
    $region7: #{tpu_custom_call.1} parent=1 // loop_footer_branch
      %15 = sbr.rel target = $region3
    $region8: #{tpu_custom_call.1} parent=1 // loop_exit
      _
    %514 = vsyncpa [#allocation3], 1
    %s515 = scalar_lea.sflag [#allocation3], 1
    %516 = vsyncpa %s515, 1

</llo_original>
